<compile_context>
chip_gen: v5e
topology: v5e:2x2
jax: 0.10.0
libtpu: 0.0.40
codegen_flags: <defaults>
</compile_context>

<pallas_src>
import jax
import jax.numpy as jnp
from jax.experimental import pallas as pl
from jax.experimental.pallas import tpu as pltpu


def _round_up(x: int, m: int) -> int:
    return ((x + m - 1) // m) * m


def _sum_pool_kernel(h_ref, m_ref, o_ref):
    # h_ref: (Bt, L, D) histories tile, native dtype (f32 / bf16 / ...)
    # m_ref: (Bt, L)    mask tile (int8 / int / float), lane-dense
    # o_ref: (Bt, D)    output tile
    h = h_ref[...]
    # In-kernel cast (free VPU op) + broadcast over D (XLU slot, also free here).
    m = m_ref[...].astype(h.dtype)[:, :, None]
    masked = h * m
    # Multiply in the input dtype; accumulate the reduction over L in float32.
    o_ref[...] = jnp.sum(masked.astype(jnp.float32), axis=1).astype(o_ref.dtype)


def sum_pooling(histories: jax.Array, mask: jax.Array,
                *, max_tile_bytes: int = 8 * 1024 * 1024) -> jax.Array:
    """histories: [B, L, D]; mask: [B, L] (bool / int / float) -> [B, D]."""
    B, L, D = histories.shape
    assert mask.shape == (B, L), f"mask shape {mask.shape} != {(B, L)}"

    # Keep the mask at 1 byte/element in HBM; the float cast happens in-kernel.
    if mask.dtype == jnp.bool_:
        mask = mask.astype(jnp.int8)

    # ---- pick the batch tile Bt: as large as the VMEM budget allows --------
    row_bytes = L * D * histories.dtype.itemsize
    bt = (max_tile_bytes // max(row_bytes, 1)) // 32 * 32
    bt = max(bt, 32)                    # multiple of 32: dense sublane layout
                                        # for f32/bf16/int8 mask+output alike
    bt = min(bt, _round_up(B, 32))      # don't tile past the (padded) batch
    # TODO(synk): for very long sequences (where even 32 rows of L*D overflow
    # the VMEM budget) add a second 'arbitrary' grid axis over L-chunks with an
    # f32 accumulator scratch (pl.when init/finalize); not needed at these shapes.

    # ---- pad the batch so Bt divides it (no ragged / OOB tail blocks) ------
    b_pad = _round_up(B, bt)
    if b_pad != B:
        histories = jnp.pad(histories, ((0, b_pad - B), (0, 0), (0, 0)))
        mask = jnp.pad(mask, ((0, b_pad - B), (0, 0)))

    grid = (b_pad // bt,)

    out = pl.pallas_call(
        _sum_pool_kernel,
        out_shape=jax.ShapeDtypeStruct((b_pad, D), histories.dtype),
        grid_spec=pltpu.PrefetchScalarGridSpec(
            num_scalar_prefetch=0,
            grid=grid,
            in_specs=[
                pl.BlockSpec((bt, L, D), lambda b: (b, 0, 0)),
                pl.BlockSpec((bt, L), lambda b: (b, 0)),
            ],
            out_specs=pl.BlockSpec((bt, D), lambda b: (b, 0)),
        ),
        compiler_params=pltpu.CompilerParams(
            dimension_semantics=("parallel",),   # megacore-shard batch blocks (v7x)
            vmem_limit_bytes=32 * 1024 * 1024,   # safe on v5e/v6e/v7x; > v5e's 16 MiB default
        ),
    )(histories, mask)

    return out[:B] if b_pad != B else out


if __name__ == "__main__":
    key = jax.random.PRNGKey(0)
    k_h, k_m, k_h2, k_m2 = jax.random.split(key, 4)

    # ---- small deterministic example: batch=2, L=8, nfields*E = 32 ----
    B, L, D = 2, 8, 32
    histories = jax.random.normal(k_h, (B, L, D), dtype=jnp.float32)
    mask = jax.random.uniform(k_m, (B, L)) > 0.3          # boolean mask

    out = jax.block_until_ready(sum_pooling(histories, mask))
    ref = jnp.sum(histories * mask.astype(jnp.float32)[:, :, None], axis=1)
    assert out.shape == (B, D)
    assert jnp.allclose(out, ref, atol=1e-5, rtol=1e-5)

    # ---- second check: ragged batch (pads internally), bf16, float mask ----
    B2, L2, D2 = 37, 16, 64
    histories2 = jax.random.normal(k_h2, (B2, L2, D2), dtype=jnp.bfloat16)
    mask2 = (jax.random.uniform(k_m2, (B2, L2)) > 0.5).astype(jnp.float32)

    out2 = jax.block_until_ready(sum_pooling(histories2, mask2))
    ref2 = jnp.sum(histories2.astype(jnp.float32) * mask2[:, :, None], axis=1)
    assert out2.shape == (B2, D2)
    assert jnp.allclose(out2.astype(jnp.float32), ref2, atol=3e-2, rtol=3e-2)

    print("KERNEL_OK")
</pallas_src>

<mosaic_0001>
module attributes {stable_mosaic.version = 11 : i64} {
  func.func @_sum_pool_kernel(%arg0: i32, %arg1: memref<32x8x32xf32, #tpu.memory_space<vmem>>, %arg2: memref<32x8xi8, #tpu.memory_space<vmem>>, %arg3: memref<32x32xf32, #tpu.memory_space<vmem>>) attributes {dimension_semantics = [#tpu.dimension_semantics<parallel>], iteration_bounds = array<i64: 1>, scalar_prefetch = 0 : i64, scratch_operands = 0 : i64, tpu.core_type = #tpu.core_type<tc>, window_params = [{transform_indices = @transform_0, window_bounds = array<i64: 32, 8, 32>}, {transform_indices = @transform_1, window_bounds = array<i64: 32, 8>}, {transform_indices = @transform_2, window_bounds = array<i64: 32, 32>}]} {
    %c0 = arith.constant 0 : index
    %c0_0 = arith.constant 0 : index
    %c0_1 = arith.constant 0 : index
    %0 = vector.load %arg1[%c0, %c0_0, %c0_1] : memref<32x8x32xf32, #tpu.memory_space<vmem>>, vector<32x8x32xf32>
    %c0_2 = arith.constant 0 : index
    %c0_3 = arith.constant 0 : index
    %1 = vector.load %arg2[%c0_2, %c0_3] : memref<32x8xi8, #tpu.memory_space<vmem>>, vector<32x8xi8>
    %2 = arith.sitofp %1 : vector<32x8xi8> to vector<32x8xf32>
    %3 = vector.shape_cast %2 : vector<32x8xf32> to vector<32x8x1xf32>
    %4 = vector.broadcast %3 : vector<32x8x1xf32> to vector<32x8x32xf32>
    %5 = arith.mulf %0, %4 : vector<32x8x32xf32>
    %cst = arith.constant dense<0.000000e+00> : vector<32x32xf32>
    %6 = vector.multi_reduction <add>, %5, %cst [1] : vector<32x8x32xf32> to vector<32x32xf32>
    %c0_4 = arith.constant 0 : index
    %c0_5 = arith.constant 0 : index
    %7 = vector.load %arg3[%c0_4, %c0_5] : memref<32x32xf32, #tpu.memory_space<vmem>>, vector<32x32xf32>
    tpu.vector_store %arg3[%c0_4, %c0_5], %6 {strides = array<i32>} : memref<32x32xf32, #tpu.memory_space<vmem>>, vector<32x32xf32>,
    return
  }
  func.func @transform_0(%arg0: i32) -> (i32, i32, i32) {
    %c0_i32 = arith.constant 0 : i32
    %c0_i32_0 = arith.constant 0 : i32
    %c0_i32_1 = arith.constant 0 : i32
    return %arg0, %c0_i32, %c0_i32_0 : i32, i32, i32
  }
  func.func @transform_1(%arg0: i32) -> (i32, i32) {
    %c0_i32 = arith.constant 0 : i32
    %c0_i32_0 = arith.constant 0 : i32
    return %arg0, %c0_i32 : i32, i32
  }
  func.func @transform_2(%arg0: i32) -> (i32, i32) {
    %c0_i32 = arith.constant 0 : i32
    %c0_i32_0 = arith.constant 0 : i32
    return %arg0, %c0_i32 : i32, i32
  }
}

</mosaic_0001>

<llo_original>
// kernel: tpu_custom_call.1
$region0: #{tpu_custom_call.1}
  #allocation0 [shape = 'u32[]', space=smem, size = 0x4, offset = 0x4, fixed_abs, tag = 'smem constant byte address 0x4 - core index']
  #allocation1 [shape = 'u32[72,128]{1,0:T(1,128)}', space=vmem, size = 0x9000, scoped, tag = 'internal scratch']
  %s0 = inlined_call_operand.hbm [shape: f32[32,8,32], index: 0, kind: input, shape index: {}]
  %s1 = inlined_call_operand.vmem [shape: s8[32,8], index: 1, kind: input, shape index: {}]
  %s2 = inlined_call_operand.hbm [shape: f32[32,32], index: 2, kind: output, shape index: {}]
  %s3 = sld [smem:[#allocation0]]
  $region22: #{tpu_custom_call.1} parent=0
    _
  %s5 = ssub.s32 1, %s3
  %s6 = scalar_select 0, %s5, %s3
  $region1: #{tpu_custom_call.1} parent=0
    #allocation2 [shape = 'u8[131072]{0}', space=vmem, size = 0x20000, scoped, tag = 'input window, operand 0, single buffered']
    #allocation3 [shape = 's32[1]{0}', space=sflag, size = 0x4, scoped, tag = 'scoped memory for tpu_custom_call.1']
    #allocation4 [shape = 's32[1]{0}', space=sflag, size = 0x4, scoped, tag = 'scoped memory for tpu_custom_call.1']
    #allocation5 [shape = 'u8[16384]{0}', space=vmem, size = 0x4000, scoped, tag = 'output window, operand 0, single buffered']
    %7 = vsyncpa [#allocation3], 0
    %8 = vsyncpa [#allocation4], 0
    // Predicated region
    $region2: #{tpu_custom_call.1} parent=1 // pred_check
      _
    $region3: #{tpu_custom_call.1} parent=1 // pred_check_branch
      %10 = sbr.rel (0) target = $region5
    $region4: #{tpu_custom_call.1} parent=1 // pred_region
      %12 = vsyncadd [#allocation3], 0
      %s13 = sshll.u32 %s0, 4
      %s14 = int_to_ptr.hbm [resolvable:$true] %s13
      %s15 = sshll.u32 [#allocation2], 4
      %s16 = int_to_ptr.vmem [resolvable:$true] %s15
      %21 = dma.hbm_to_vmem [thread:$0]  %s14, 4096, %s16, [#allocation3], 128, 128, 8
    $region5: #{tpu_custom_call.1} parent=1 // pred_fallthru
      _
    // Predicated region
    $region6: #{tpu_custom_call.1} parent=1 // pred_check
      _
    $region7: #{tpu_custom_call.1} parent=1 // pred_check_branch
      %23 = sbr.rel (0) target = $region9
    $region8: #{tpu_custom_call.1} parent=1 // pred_region
      _
    $region9: #{tpu_custom_call.1} parent=1 // pred_fallthru
      _
    // Predicated region
    $region10: #{tpu_custom_call.1} parent=1 // pred_check
      _
    $region11: #{tpu_custom_call.1} parent=1 // pred_check_branch
      %25 = sbr.rel (0) target = $region13
    $region12: #{tpu_custom_call.1} parent=1 // pred_region
      %27 = dma.done [#allocation3], 4096
    $region13: #{tpu_custom_call.1} parent=1 // pred_fallthru
      _
    %v28 = vld [vmem:[#allocation2] sm:$0xff]
    %v29 = vld [vmem:[#allocation2 + $0x8] sm:$0xff]
    %v30 = vld [vmem:[#allocation2 + $0x10] sm:$0xff]
    %v31 = vld [vmem:[#allocation2 + $0x18] sm:$0xff]
    %v32 = vld [vmem:[#allocation2 + $0x20] sm:$0xff]
    %v33 = vld [vmem:[#allocation2 + $0x28] sm:$0xff]
    %v34 = vld [vmem:[#allocation2 + $0x30] sm:$0xff]
    %v35 = vld [vmem:[#allocation2 + $0x38] sm:$0xff]
    %v36 = vld [vmem:[#allocation2 + $0x40] sm:$0xff]
    %v37 = vld [vmem:[#allocation2 + $0x48] sm:$0xff]
    %v38 = vld [vmem:[#allocation2 + $0x50] sm:$0xff]
    %v39 = vld [vmem:[#allocation2 + $0x58] sm:$0xff]
    %v40 = vld [vmem:[#allocation2 + $0x60] sm:$0xff]
    %v41 = vld [vmem:[#allocation2 + $0x68] sm:$0xff]
    %v42 = vld [vmem:[#allocation2 + $0x70] sm:$0xff]
    %v43 = vld [vmem:[#allocation2 + $0x78] sm:$0xff]
    %v44 = vld [vmem:[#allocation2 + $0x80] sm:$0xff]
    %v45 = vld [vmem:[#allocation2 + $0x88] sm:$0xff]
    %v46 = vld [vmem:[#allocation2 + $0x90] sm:$0xff]
    %v47 = vld [vmem:[#allocation2 + $0x98] sm:$0xff]
    %v48 = vld [vmem:[#allocation2 + $0xa0] sm:$0xff]
    %v49 = vld [vmem:[#allocation2 + $0xa8] sm:$0xff]
    %v50 = vld [vmem:[#allocation2 + $0xb0] sm:$0xff]
    %v51 = vld [vmem:[#allocation2 + $0xb8] sm:$0xff]
    %v52 = vld [vmem:[#allocation2 + $0xc0] sm:$0xff]
    %v53 = vld [vmem:[#allocation2 + $0xc8] sm:$0xff]
    %v54 = vld [vmem:[#allocation2 + $0xd0] sm:$0xff]
    %v55 = vld [vmem:[#allocation2 + $0xd8] sm:$0xff]
    %v56 = vld [vmem:[#allocation2 + $0xe0] sm:$0xff]
    %v57 = vld [vmem:[#allocation2 + $0xe8] sm:$0xff]
    %v58 = vld [vmem:[#allocation2 + $0xf0] sm:$0xff]
    %v59 = vld [vmem:[#allocation2 + $0xf8] sm:$0xff]
    %v60 = vld [vmem:[%s1] sm:$0x3]
    %v61 = vld [vmem:[%s1 + $0x2] sm:$0x3]
    %v62 = vld [vmem:[%s1 + $0x4] sm:$0x3]
    %v63 = vld [vmem:[%s1 + $0x6] sm:$0x3]
    %v64 = vunpack.c.0.s8 %v60
    %v65 = vunpack.c.0.s8 %v61
    %v66 = vunpack.c.0.s8 %v62
    %v67 = vunpack.c.0.s8 %v63
    %v68 = vcvt.s32.f32 %v64
    %v69 = vcvt.s32.f32 %v65
    %v70 = vcvt.s32.f32 %v66
    %v71 = vcvt.s32.f32 %v67
    %v72 = vperm.slane %v68, 0
    %v73 = vlaneseq
    %v74 = vshrl.u32 %v73, 7
    %76 = vset.pattern.permute.xlu0 %v74
    %77 = vperm.xlu0 %76, %v72
    %v78 = vpop.permute.xlu0 %77
    %v79 = vperm.slane %v68, 1
    %v80 = vlaneseq
    %v81 = vshrl.u32 %v80, 7
    %83 = vset.pattern.permute.xlu0 %v81
    %84 = vperm.xlu0 %83, %v79
    %v85 = vpop.permute.xlu0 %84
    %v86 = vperm.slane %v68, 2
    %v87 = vlaneseq
    %v88 = vshrl.u32 %v87, 7
    %90 = vset.pattern.permute.xlu0 %v88
    %91 = vperm.xlu0 %90, %v86
    %v92 = vpop.permute.xlu0 %91
    %v93 = vperm.slane %v68, 3
    %v94 = vlaneseq
    %v95 = vshrl.u32 %v94, 7
    %97 = vset.pattern.permute.xlu0 %v95
    %98 = vperm.xlu0 %97, %v93
    %v99 = vpop.permute.xlu0 %98
    %v100 = vperm.slane %v68, 4
    %v101 = vlaneseq
    %v102 = vshrl.u32 %v101, 7
    %104 = vset.pattern.permute.xlu0 %v102
    %105 = vperm.xlu0 %104, %v100
    %v106 = vpop.permute.xlu0 %105
    %v107 = vperm.slane %v68, 5
    %v108 = vlaneseq
    %v109 = vshrl.u32 %v108, 7
    %111 = vset.pattern.permute.xlu0 %v109
    %112 = vperm.xlu0 %111, %v107
    %v113 = vpop.permute.xlu0 %112
    %v114 = vperm.slane %v68, 6
    %v115 = vlaneseq
    %v116 = vshrl.u32 %v115, 7
    %118 = vset.pattern.permute.xlu0 %v116
    %119 = vperm.xlu0 %118, %v114
    %v120 = vpop.permute.xlu0 %119
    %v121 = vperm.slane %v68, 7
    %v122 = vlaneseq
    %v123 = vshrl.u32 %v122, 7
    %125 = vset.pattern.permute.xlu0 %v123
    %126 = vperm.xlu0 %125, %v121
    %v127 = vpop.permute.xlu0 %126
    %v128 = vperm.slane %v69, 0
    %v129 = vlaneseq
    %v130 = vshrl.u32 %v129, 7
    %132 = vset.pattern.permute.xlu0 %v130
    %133 = vperm.xlu0 %132, %v128
    %v134 = vpop.permute.xlu0 %133
    %v135 = vperm.slane %v69, 1
    %v136 = vlaneseq
    %v137 = vshrl.u32 %v136, 7
    %139 = vset.pattern.permute.xlu0 %v137
    %140 = vperm.xlu0 %139, %v135
    %v141 = vpop.permute.xlu0 %140
    %v142 = vperm.slane %v69, 2
    %v143 = vlaneseq
    %v144 = vshrl.u32 %v143, 7
    %146 = vset.pattern.permute.xlu0 %v144
    %147 = vperm.xlu0 %146, %v142
    %v148 = vpop.permute.xlu0 %147
    %v149 = vperm.slane %v69, 3
    %v150 = vlaneseq
    %v151 = vshrl.u32 %v150, 7
    %153 = vset.pattern.permute.xlu0 %v151
    %154 = vperm.xlu0 %153, %v149
    %v155 = vpop.permute.xlu0 %154
    %v156 = vperm.slane %v69, 4
    %v157 = vlaneseq
    %v158 = vshrl.u32 %v157, 7
    %160 = vset.pattern.permute.xlu0 %v158
    %161 = vperm.xlu0 %160, %v156
    %v162 = vpop.permute.xlu0 %161
    %v163 = vperm.slane %v69, 5
    %v164 = vlaneseq
    %v165 = vshrl.u32 %v164, 7
    %167 = vset.pattern.permute.xlu0 %v165
    %168 = vperm.xlu0 %167, %v163
    %v169 = vpop.permute.xlu0 %168
    %v170 = vperm.slane %v69, 6
    %v171 = vlaneseq
    %v172 = vshrl.u32 %v171, 7
    %174 = vset.pattern.permute.xlu0 %v172
    %175 = vperm.xlu0 %174, %v170
    %v176 = vpop.permute.xlu0 %175
    %v177 = vperm.slane %v69, 7
    %v178 = vlaneseq
    %v179 = vshrl.u32 %v178, 7
    %181 = vset.pattern.permute.xlu0 %v179
    %182 = vperm.xlu0 %181, %v177
    %v183 = vpop.permute.xlu0 %182
    %v184 = vperm.slane %v70, 0
    %v185 = vlaneseq
    %v186 = vshrl.u32 %v185, 7
    %188 = vset.pattern.permute.xlu0 %v186
    %189 = vperm.xlu0 %188, %v184
    %v190 = vpop.permute.xlu0 %189
    %v191 = vperm.slane %v70, 1
    %v192 = vlaneseq
    %v193 = vshrl.u32 %v192, 7
    %195 = vset.pattern.permute.xlu0 %v193
    %196 = vperm.xlu0 %195, %v191
    %v197 = vpop.permute.xlu0 %196
    %v198 = vperm.slane %v70, 2
    %v199 = vlaneseq
    %v200 = vshrl.u32 %v199, 7
    %202 = vset.pattern.permute.xlu0 %v200
    %203 = vperm.xlu0 %202, %v198
    %v204 = vpop.permute.xlu0 %203
    %v205 = vperm.slane %v70, 3
    %v206 = vlaneseq
    %v207 = vshrl.u32 %v206, 7
    %209 = vset.pattern.permute.xlu0 %v207
    %210 = vperm.xlu0 %209, %v205
    %v211 = vpop.permute.xlu0 %210
    %v212 = vperm.slane %v70, 4
    %v213 = vlaneseq
    %v214 = vshrl.u32 %v213, 7
    %216 = vset.pattern.permute.xlu0 %v214
    %217 = vperm.xlu0 %216, %v212
    %v218 = vpop.permute.xlu0 %217
    %v219 = vperm.slane %v70, 5
    %v220 = vlaneseq
    %v221 = vshrl.u32 %v220, 7
    %223 = vset.pattern.permute.xlu0 %v221
    %224 = vperm.xlu0 %223, %v219
    %v225 = vpop.permute.xlu0 %224
    %v226 = vperm.slane %v70, 6
    %v227 = vlaneseq
    %v228 = vshrl.u32 %v227, 7
    %230 = vset.pattern.permute.xlu0 %v228
    %231 = vperm.xlu0 %230, %v226
    %v232 = vpop.permute.xlu0 %231
    %v233 = vperm.slane %v70, 7
    %v234 = vlaneseq
    %v235 = vshrl.u32 %v234, 7
    %237 = vset.pattern.permute.xlu0 %v235
    %238 = vperm.xlu0 %237, %v233
    %v239 = vpop.permute.xlu0 %238
    %v240 = vperm.slane %v71, 0
    %v241 = vlaneseq
    %v242 = vshrl.u32 %v241, 7
    %244 = vset.pattern.permute.xlu0 %v242
    %245 = vperm.xlu0 %244, %v240
    %v246 = vpop.permute.xlu0 %245
    %v247 = vperm.slane %v71, 1
    %v248 = vlaneseq
    %v249 = vshrl.u32 %v248, 7
    %251 = vset.pattern.permute.xlu0 %v249
    %252 = vperm.xlu0 %251, %v247
    %v253 = vpop.permute.xlu0 %252
    %v254 = vperm.slane %v71, 2
    %v255 = vlaneseq
    %v256 = vshrl.u32 %v255, 7
    %258 = vset.pattern.permute.xlu0 %v256
    %259 = vperm.xlu0 %258, %v254
    %v260 = vpop.permute.xlu0 %259
    %v261 = vperm.slane %v71, 3
    %v262 = vlaneseq
    %v263 = vshrl.u32 %v262, 7
    %265 = vset.pattern.permute.xlu0 %v263
    %266 = vperm.xlu0 %265, %v261
    %v267 = vpop.permute.xlu0 %266
    %v268 = vperm.slane %v71, 4
    %v269 = vlaneseq
    %v270 = vshrl.u32 %v269, 7
    %272 = vset.pattern.permute.xlu0 %v270
    %273 = vperm.xlu0 %272, %v268
    %v274 = vpop.permute.xlu0 %273
    %v275 = vperm.slane %v71, 5
    %v276 = vlaneseq
    %v277 = vshrl.u32 %v276, 7
    %279 = vset.pattern.permute.xlu0 %v277
    %280 = vperm.xlu0 %279, %v275
    %v281 = vpop.permute.xlu0 %280
    %v282 = vperm.slane %v71, 6
    %v283 = vlaneseq
    %v284 = vshrl.u32 %v283, 7
    %286 = vset.pattern.permute.xlu0 %v284
    %287 = vperm.xlu0 %286, %v282
    %v288 = vpop.permute.xlu0 %287
    %v289 = vperm.slane %v71, 7
    %v290 = vlaneseq
    %v291 = vshrl.u32 %v290, 7
    %293 = vset.pattern.permute.xlu0 %v291
    %294 = vperm.xlu0 %293, %v289
    %v295 = vpop.permute.xlu0 %294
    %v296 = vmul.f32 %v28, %v78
    %v297 = vmul.f32 %v29, %v85
    %v298 = vmul.f32 %v30, %v92
    %v299 = vmul.f32 %v31, %v99
    %v300 = vmul.f32 %v32, %v106
    %v301 = vmul.f32 %v33, %v113
    %v302 = vmul.f32 %v34, %v120
    %v303 = vmul.f32 %v35, %v127
    %v304 = vmul.f32 %v36, %v134
    %v305 = vmul.f32 %v37, %v141
    %v306 = vmul.f32 %v38, %v148
    %v307 = vmul.f32 %v39, %v155
    %v308 = vmul.f32 %v40, %v162
    %v309 = vmul.f32 %v41, %v169
    %v310 = vmul.f32 %v42, %v176
    %v311 = vmul.f32 %v43, %v183
    %v312 = vmul.f32 %v44, %v190
    %v313 = vmul.f32 %v45, %v197
    %v314 = vmul.f32 %v46, %v204
    %v315 = vmul.f32 %v47, %v211
    %v316 = vmul.f32 %v48, %v218
    %v317 = vmul.f32 %v49, %v225
    %v318 = vmul.f32 %v50, %v232
    %v319 = vmul.f32 %v51, %v239
    %v320 = vmul.f32 %v52, %v246
    %v321 = vmul.f32 %v53, %v253
    %v322 = vmul.f32 %v54, %v260
    %v323 = vmul.f32 %v55, %v267
    %v324 = vmul.f32 %v56, %v274
    %v325 = vmul.f32 %v57, %v281
    %v326 = vmul.f32 %v58, %v288
    %v327 = vmul.f32 %v59, %v295
    %vm328 = vcmask 261120
    %v329 = vsel %vm328, %v296, 0.0
    %v330 = vrot.slane %v329, 4
    %v331 = vadd.f32 %v329, %v330
    %v332 = vrot.slane %v331, 2
    %v333 = vadd.f32 %v331, %v332
    %v334 = vrot.slane %v333, 1
    %v335 = vadd.f32 %v333, %v334
    %v336 = vsel %vm328, %v297, 0.0
    %v337 = vrot.slane %v336, 4
    %v338 = vadd.f32 %v336, %v337
    %v339 = vrot.slane %v338, 2
    %v340 = vadd.f32 %v338, %v339
    %v341 = vrot.slane %v340, 1
    %v342 = vadd.f32 %v340, %v341
    %v343 = vsel %vm328, %v298, 0.0
    %v344 = vrot.slane %v343, 4
    %v345 = vadd.f32 %v343, %v344
    %v346 = vrot.slane %v345, 2
    %v347 = vadd.f32 %v345, %v346
    %v348 = vrot.slane %v347, 1
    %v349 = vadd.f32 %v347, %v348
    %v350 = vsel %vm328, %v299, 0.0
    %v351 = vrot.slane %v350, 4
    %v352 = vadd.f32 %v350, %v351
    %v353 = vrot.slane %v352, 2
    %v354 = vadd.f32 %v352, %v353
    %v355 = vrot.slane %v354, 1
    %v356 = vadd.f32 %v354, %v355
    %v357 = vsel %vm328, %v300, 0.0
    %v358 = vrot.slane %v357, 4
    %v359 = vadd.f32 %v357, %v358
    %v360 = vrot.slane %v359, 2
    %v361 = vadd.f32 %v359, %v360
    %v362 = vrot.slane %v361, 1
    %v363 = vadd.f32 %v361, %v362
    %v364 = vsel %vm328, %v301, 0.0
    %v365 = vrot.slane %v364, 4
    %v366 = vadd.f32 %v364, %v365
    %v367 = vrot.slane %v366, 2
    %v368 = vadd.f32 %v366, %v367
    %v369 = vrot.slane %v368, 1
    %v370 = vadd.f32 %v368, %v369
    %v371 = vsel %vm328, %v302, 0.0
    %v372 = vrot.slane %v371, 4
    %v373 = vadd.f32 %v371, %v372
    %v374 = vrot.slane %v373, 2
    %v375 = vadd.f32 %v373, %v374
    %v376 = vrot.slane %v375, 1
    %v377 = vadd.f32 %v375, %v376
    %v378 = vsel %vm328, %v303, 0.0
    %v379 = vrot.slane %v378, 4
    %v380 = vadd.f32 %v378, %v379
    %v381 = vrot.slane %v380, 2
    %v382 = vadd.f32 %v380, %v381
    %v383 = vrot.slane %v382, 1
    %v384 = vadd.f32 %v382, %v383
    %v385 = vsel %vm328, %v304, 0.0
    %v386 = vrot.slane %v385, 4
    %v387 = vadd.f32 %v385, %v386
    %v388 = vrot.slane %v387, 2
    %v389 = vadd.f32 %v387, %v388
    %v390 = vrot.slane %v389, 1
    %v391 = vadd.f32 %v389, %v390
    %v392 = vsel %vm328, %v305, 0.0
    %v393 = vrot.slane %v392, 4
    %v394 = vadd.f32 %v392, %v393
    %v395 = vrot.slane %v394, 2
    %v396 = vadd.f32 %v394, %v395
    %v397 = vrot.slane %v396, 1
    %v398 = vadd.f32 %v396, %v397
    %v399 = vsel %vm328, %v306, 0.0
    %v400 = vrot.slane %v399, 4
    %v401 = vadd.f32 %v399, %v400
    %v402 = vrot.slane %v401, 2
    %v403 = vadd.f32 %v401, %v402
    %v404 = vrot.slane %v403, 1
    %v405 = vadd.f32 %v403, %v404
    %v406 = vsel %vm328, %v307, 0.0
    %v407 = vrot.slane %v406, 4
    %v408 = vadd.f32 %v406, %v407
    %v409 = vrot.slane %v408, 2
    %v410 = vadd.f32 %v408, %v409
    %v411 = vrot.slane %v410, 1
    %v412 = vadd.f32 %v410, %v411
    %v413 = vsel %vm328, %v308, 0.0
    %v414 = vrot.slane %v413, 4
    %v415 = vadd.f32 %v413, %v414
    %v416 = vrot.slane %v415, 2
    %v417 = vadd.f32 %v415, %v416
    %v418 = vrot.slane %v417, 1
    %v419 = vadd.f32 %v417, %v418
    %v420 = vsel %vm328, %v309, 0.0
    %v421 = vrot.slane %v420, 4
    %v422 = vadd.f32 %v420, %v421
    %v423 = vrot.slane %v422, 2
    %v424 = vadd.f32 %v422, %v423
    %v425 = vrot.slane %v424, 1
    %v426 = vadd.f32 %v424, %v425
    %v427 = vsel %vm328, %v310, 0.0
    %v428 = vrot.slane %v427, 4
    %v429 = vadd.f32 %v427, %v428
    %v430 = vrot.slane %v429, 2
    %v431 = vadd.f32 %v429, %v430
    %v432 = vrot.slane %v431, 1
    %v433 = vadd.f32 %v431, %v432
    %v434 = vsel %vm328, %v311, 0.0
    %v435 = vrot.slane %v434, 4
    %v436 = vadd.f32 %v434, %v435
    %v437 = vrot.slane %v436, 2
    %v438 = vadd.f32 %v436, %v437
    %v439 = vrot.slane %v438, 1
    %v440 = vadd.f32 %v438, %v439
    %v441 = vsel %vm328, %v312, 0.0
    %v442 = vrot.slane %v441, 4
    %v443 = vadd.f32 %v441, %v442
    %v444 = vrot.slane %v443, 2
    %v445 = vadd.f32 %v443, %v444
    %v446 = vrot.slane %v445, 1
    %v447 = vadd.f32 %v445, %v446
    %v448 = vsel %vm328, %v313, 0.0
    %v449 = vrot.slane %v448, 4
    %v450 = vadd.f32 %v448, %v449
    %v451 = vrot.slane %v450, 2
    %v452 = vadd.f32 %v450, %v451
    %v453 = vrot.slane %v452, 1
    %v454 = vadd.f32 %v452, %v453
    %v455 = vsel %vm328, %v314, 0.0
    %v456 = vrot.slane %v455, 4
    %v457 = vadd.f32 %v455, %v456
    %v458 = vrot.slane %v457, 2
    %v459 = vadd.f32 %v457, %v458
    %v460 = vrot.slane %v459, 1
    %v461 = vadd.f32 %v459, %v460
    %v462 = vsel %vm328, %v315, 0.0
    %v463 = vrot.slane %v462, 4
    %v464 = vadd.f32 %v462, %v463
    %v465 = vrot.slane %v464, 2
    %v466 = vadd.f32 %v464, %v465
    %v467 = vrot.slane %v466, 1
    %v468 = vadd.f32 %v466, %v467
    %v469 = vsel %vm328, %v316, 0.0
    %v470 = vrot.slane %v469, 4
    %v471 = vadd.f32 %v469, %v470
    %v472 = vrot.slane %v471, 2
    %v473 = vadd.f32 %v471, %v472
    %v474 = vrot.slane %v473, 1
    %v475 = vadd.f32 %v473, %v474
    %v476 = vsel %vm328, %v317, 0.0
    %v477 = vrot.slane %v476, 4
    %v478 = vadd.f32 %v476, %v477
    %v479 = vrot.slane %v478, 2
    %v480 = vadd.f32 %v478, %v479
    %v481 = vrot.slane %v480, 1
    %v482 = vadd.f32 %v480, %v481
    %v483 = vsel %vm328, %v318, 0.0
    %v484 = vrot.slane %v483, 4
    %v485 = vadd.f32 %v483, %v484
    %v486 = vrot.slane %v485, 2
    %v487 = vadd.f32 %v485, %v486
    %v488 = vrot.slane %v487, 1
    %v489 = vadd.f32 %v487, %v488
    %v490 = vsel %vm328, %v319, 0.0
    %v491 = vrot.slane %v490, 4
    %v492 = vadd.f32 %v490, %v491
    %v493 = vrot.slane %v492, 2
    %v494 = vadd.f32 %v492, %v493
    %v495 = vrot.slane %v494, 1
    %v496 = vadd.f32 %v494, %v495
    %v497 = vsel %vm328, %v320, 0.0
    %v498 = vrot.slane %v497, 4
    %v499 = vadd.f32 %v497, %v498
    %v500 = vrot.slane %v499, 2
    %v501 = vadd.f32 %v499, %v500
    %v502 = vrot.slane %v501, 1
    %v503 = vadd.f32 %v501, %v502
    %v504 = vsel %vm328, %v321, 0.0
    %v505 = vrot.slane %v504, 4
    %v506 = vadd.f32 %v504, %v505
    %v507 = vrot.slane %v506, 2
    %v508 = vadd.f32 %v506, %v507
    %v509 = vrot.slane %v508, 1
    %v510 = vadd.f32 %v508, %v509
    %v511 = vsel %vm328, %v322, 0.0
    %v512 = vrot.slane %v511, 4
    %v513 = vadd.f32 %v511, %v512
    %v514 = vrot.slane %v513, 2
    %v515 = vadd.f32 %v513, %v514
    %v516 = vrot.slane %v515, 1
    %v517 = vadd.f32 %v515, %v516
    %v518 = vsel %vm328, %v323, 0.0
    %v519 = vrot.slane %v518, 4
    %v520 = vadd.f32 %v518, %v519
    %v521 = vrot.slane %v520, 2
    %v522 = vadd.f32 %v520, %v521
    %v523 = vrot.slane %v522, 1
    %v524 = vadd.f32 %v522, %v523
    %v525 = vsel %vm328, %v324, 0.0
    %v526 = vrot.slane %v525, 4
    %v527 = vadd.f32 %v525, %v526
    %v528 = vrot.slane %v527, 2
    %v529 = vadd.f32 %v527, %v528
    %v530 = vrot.slane %v529, 1
    %v531 = vadd.f32 %v529, %v530
    %v532 = vsel %vm328, %v325, 0.0
    %v533 = vrot.slane %v532, 4
    %v534 = vadd.f32 %v532, %v533
    %v535 = vrot.slane %v534, 2
    %v536 = vadd.f32 %v534, %v535
    %v537 = vrot.slane %v536, 1
    %v538 = vadd.f32 %v536, %v537
    %v539 = vsel %vm328, %v326, 0.0
    %v540 = vrot.slane %v539, 4
    %v541 = vadd.f32 %v539, %v540
    %v542 = vrot.slane %v541, 2
    %v543 = vadd.f32 %v541, %v542
    %v544 = vrot.slane %v543, 1
    %v545 = vadd.f32 %v543, %v544
    %v546 = vsel %vm328, %v327, 0.0
    %v547 = vrot.slane %v546, 4
    %v548 = vadd.f32 %v546, %v547
    %v549 = vrot.slane %v548, 2
    %v550 = vadd.f32 %v548, %v549
    %v551 = vrot.slane %v550, 1
    %v552 = vadd.f32 %v550, %v551
    %vm585 = vcmask 1041409
    %v586 = vsel %vm585, %v342, %v335
    %vm587 = vcmask 1042434
    %v588 = vsel %vm587, %v349, %v586
    %vm589 = vcmask 1043459
    %v590 = vsel %vm589, %v356, %v588
    %vm591 = vcmask 1044484
    %v592 = vsel %vm591, %v363, %v590
    %vm593 = vcmask 1045509
    %v594 = vsel %vm593, %v370, %v592
    %vm595 = vcmask 1046534
    %v596 = vsel %vm595, %v377, %v594
    %vm597 = vcmask 1047559
    %v598 = vsel %vm597, %v384, %v596
    %v599 = vsel %vm585, %v398, %v391
    %v600 = vsel %vm587, %v405, %v599
    %v601 = vsel %vm589, %v412, %v600
    %v602 = vsel %vm591, %v419, %v601
    %v603 = vsel %vm593, %v426, %v602
    %v604 = vsel %vm595, %v433, %v603
    %v605 = vsel %vm597, %v440, %v604
    %v606 = vsel %vm585, %v454, %v447
    %v607 = vsel %vm587, %v461, %v606
    %v608 = vsel %vm589, %v468, %v607
    %v609 = vsel %vm591, %v475, %v608
    %v610 = vsel %vm593, %v482, %v609
    %v611 = vsel %vm595, %v489, %v610
    %v612 = vsel %vm597, %v496, %v611
    %v613 = vsel %vm585, %v510, %v503
    %v614 = vsel %vm587, %v517, %v613
    %v615 = vsel %vm589, %v524, %v614
    %v616 = vsel %vm591, %v531, %v615
    %v617 = vsel %vm593, %v538, %v616
    %v618 = vsel %vm595, %v545, %v617
    %v619 = vsel %vm597, %v552, %v618
    %624 = vst.msk [vmem:[#allocation5] sm:$0xff] %vm328, %v598
    %625 = vst.msk [vmem:[#allocation5 + $0x8] sm:$0xff] %vm328, %v605
    %626 = vst.msk [vmem:[#allocation5 + $0x10] sm:$0xff] %vm328, %v612
    %627 = vst.msk [vmem:[#allocation5 + $0x18] sm:$0xff] %vm328, %v619
    // Predicated region
    $region14: #{tpu_custom_call.1} parent=1 // pred_check
      _
    $region15: #{tpu_custom_call.1} parent=1 // pred_check_branch
      %629 = sbr.rel (0) target = $region17
    $region16: #{tpu_custom_call.1} parent=1 // pred_region
      %631 = vsyncadd [#allocation4], 0
      %s632 = sshll.u32 [#allocation5], 4
      %s633 = int_to_ptr.vmem [resolvable:$true] %s632
      %s634 = sshll.u32 %s2, 4
      %s635 = int_to_ptr.hbm [resolvable:$true] %s634
      %640 = dma.vmem_to_hbm [thread:$0]  %s633, 512, %s635, [#allocation4], 128, 128, 8
    $region17: #{tpu_custom_call.1} parent=1 // pred_fallthru
      _
    // Predicated region
    $region18: #{tpu_custom_call.1} parent=1 // pred_check
      _
    $region19: #{tpu_custom_call.1} parent=1 // pred_check_branch
      %642 = sbr.rel (0) target = $region21
    $region20: #{tpu_custom_call.1} parent=1 // pred_region
      %644 = dma.done [#allocation4], 512
    $region21: #{tpu_custom_call.1} parent=1 // pred_fallthru
      _
    %645 = vsyncpa [#allocation3], 1
    %646 = vsyncpa [#allocation4], 1

</llo_original>
